<compile_context>
chip_gen: v6e
topology: v6e:2x2x1
jax: 0.10.0
libtpu: 0.0.40
codegen_flags: <defaults>
</compile_context>

<pallas_src>
import jax
import jax.numpy as jnp
from jax.experimental import pallas as pl
from jax.experimental.pallas import tpu as pltpu


def _round_up(x, m):
    return (x + m - 1) // m * m


def _vmem_capacity_bytes():
    # Physical VMEM per TensorCore; conservative 64 MiB (v7x) fallback so the
    # tiling never assumes more VMEM than any supported generation has.
    try:
        cap = int(pltpu.get_tpu_info().vmem_capacity_bytes)
        if cap > 0:
            return cap
    except Exception:
        pass
    return 64 * 1024 * 1024


def _gelu_exact(h):
    # Exact GELU (matches torch.nn.GELU(approximate='none')); erf goes to EUP.
    return 0.5 * h * (1.0 + jax.lax.erf(h * 0.7071067811865476))


def _mlp_kernel_resident(x_ref, w1_ref, b1_ref, w2_ref, b2_ref, o_ref):
    """Fast path: full W1/W2 resident in VMEM, 1-D grid over row tiles."""
    h = jnp.dot(x_ref[...], w1_ref[...], preferred_element_type=jnp.float32)
    h = h + b1_ref[...].astype(jnp.float32)
    h = _gelu_exact(h)
    y = jnp.dot(h.astype(w2_ref.dtype), w2_ref[...],
                preferred_element_type=jnp.float32)
    y = y + b2_ref[...].astype(jnp.float32)
    # dropout (eval mode) == identity
    o_ref[...] = y.astype(o_ref.dtype)


def _mlp_kernel_chunked(x_ref, w1_ref, b1_ref, w2_ref, b2_ref, o_ref, *scratch):
    """Tiled path: hidden dim chunked on an 'arbitrary' (reduction) grid axis."""
    # For f32 outputs we accumulate directly into o_ref (it stays resident
    # across the hidden axis); otherwise an f32 VMEM scratch accumulator.
    acc_ref = scratch[0] if scratch else o_ref
    h_idx = pl.program_id(1)

    @pl.when(h_idx == 0)
    def _():
        acc_ref[...] = jnp.zeros_like(acc_ref)

    h = jnp.dot(x_ref[...], w1_ref[...], preferred_element_type=jnp.float32)
    h = h + b1_ref[...].astype(jnp.float32)
    h = _gelu_exact(h)
    acc_ref[...] += jnp.dot(h.astype(w2_ref.dtype), w2_ref[...],
                            preferred_element_type=jnp.float32)

    @pl.when(h_idx == pl.num_programs(1) - 1)
    def _():
        y = acc_ref[...] + b2_ref[...].astype(jnp.float32)
        # dropout (eval mode) == identity
        o_ref[...] = y.astype(o_ref.dtype)


def mlp_block(x, w1, b1, w2, b2, *, tm=None, th=512, matmul_in_bf16=False):
    """x: (batch, seq, dim); w1: (dim, hidden); w2: (hidden, dim)."""
    batch, seq, dim = x.shape
    hidden = w1.shape[1]
    rows = batch * seq

    out_dtype = x.dtype
    out_isz = jnp.dtype(out_dtype).itemsize

    # Optional bf16 MXU feeds for f32 inputs (accumulation stays f32). Opt-in.
    use_bf16 = matmul_in_bf16 and jnp.dtype(x.dtype) == jnp.float32
    mat_dtype = jnp.bfloat16 if use_bf16 else x.dtype
    mat_isz = jnp.dtype(mat_dtype).itemsize
    b_isz = jnp.dtype(b1.dtype).itemsize

    # 256-alignment: full 2x256x256 MXU passes on v6e/v7x (v5e's 128 is implied).
    dim_p = _round_up(dim, 256)
    hidden_p = _round_up(hidden, 256)

    # Row tile: large enough that weight streaming beats the HBM roofline;
    # floor is the native sublane packing for the matmul dtype (8/16/32 rows).
    row_align = {4: 8, 2: 16, 1: 32}.get(mat_isz, 8)
    if tm is None:
        tm = 512 if mat_isz >= 4 else 1024
    tm = _round_up(max(row_align, min(tm, _round_up(rows, row_align))), row_align)
    # Keep at least two row tiles where possible so both v7x TCs get work.
    while tm >= rows and tm > row_align:
        tm = max(row_align, _round_up(tm // 2, row_align))

    # Hidden chunk (tiled path only), multiple of 256.
    th = _round_up(max(256, min(th, hidden_p)), 256)

    def fast_footprint(tm_):
        return (2 * tm_ * dim_p * mat_isz            # x tile (double-buffered)
                + 2 * tm_ * dim_p * out_isz          # out tile
                + 2 * dim_p * hidden_p * mat_isz     # w1 (2 bufs, conservative)
                + 2 * hidden_p * dim_p * mat_isz     # w2
                + 2 * (hidden_p + dim_p) * b_isz     # biases
                + tm_ * hidden_p * (4 + mat_isz))    # fc1 activations (f32 + cast)

    def chunked_footprint(tm_, th_):
        acc = 0 if jnp.dtype(out_dtype) == jnp.float32 else tm_ * dim_p * 4
        return (2 * tm_ * dim_p * mat_isz
                + 2 * tm_ * dim_p * out_isz
                + 2 * dim_p * th_ * mat_isz
                + 2 * th_ * dim_p * mat_isz
                + 2 * (th_ + dim_p) * b_isz
                + tm_ * th_ * (4 + mat_isz)
                + acc)

    vmem_cap = _vmem_capacity_bytes()
    budget = int(0.70 * vmem_cap)

    use_resident = fast_footprint(tm) <= budget
    if use_resident:
        footprint = fast_footprint(tm)
    else:
        # Shrink the hidden chunk first, then the row tile, until it fits.
        while chunked_footprint(tm, th) > budget and th > 256:
            th = max(256, (th // 2) // 256 * 256)
        while chunked_footprint(tm, th) > budget and tm > row_align:
            tm = max(row_align, _round_up(tm // 2, row_align))
        footprint = chunked_footprint(tm, th)
        hidden_p = _round_up(hidden_p, th)  # hidden chunks must tile evenly

    rows_p = _round_up(rows, tm)
    num_row_tiles = rows_p // tm

    # Zero-padding is exact: padded hidden channels see bias 0 -> GELU(0)=0 ->
    # contribute nothing to fc2; padded rows / output columns are sliced off.
    x2d = jnp.pad(x.reshape(rows, dim).astype(mat_dtype),
                  ((0, rows_p - rows), (0, dim_p - dim)))
    w1p = jnp.pad(w1.astype(mat_dtype),
                  ((0, dim_p - dim), (0, hidden_p - hidden)))
    b1p = jnp.pad(b1.reshape(1, hidden), ((0, 0), (0, hidden_p - hidden)))
    w2p = jnp.pad(w2.astype(mat_dtype),
                  ((0, hidden_p - hidden), (0, dim_p - dim)))
    b2p = jnp.pad(b2.reshape(1, dim), ((0, 0), (0, dim_p - dim)))

    # Scoped VMEM: raise above the default when needed, but never to the full
    # physical VMEM (v7x per-TC VMEM is only 64 MiB; leave compiler headroom).
    vmem_limit = max(32 * 1024 * 1024, int(footprint * 1.25))
    vmem_limit = min(vmem_limit, int(0.75 * vmem_cap))

    flops = 4 * rows_p * dim_p * hidden_p           # two matmuls
    transcendentals = rows_p * hidden_p             # erf

    if use_resident:
        cost = pl.CostEstimate(
            flops=flops, transcendentals=transcendentals,
            bytes_accessed=int(rows_p * dim_p * (mat_isz + out_isz)
                               + 2 * dim_p * hidden_p * mat_isz
                               + (hidden_p + dim_p) * b_isz))
        out = pl.pallas_call(
            _mlp_kernel_resident,
            out_shape=jax.ShapeDtypeStruct((rows_p, dim_p), out_dtype),
            grid_spec=pltpu.PrefetchScalarGridSpec(
                num_scalar_prefetch=0,
                grid=(num_row_tiles,),
                in_specs=[
                    pl.BlockSpec((tm, dim_p), lambda i: (i, 0)),        # x tile
                    pl.BlockSpec((dim_p, hidden_p), lambda i: (0, 0)),  # w1 resident
                    pl.BlockSpec((1, hidden_p), lambda i: (0, 0)),      # b1
                    pl.BlockSpec((hidden_p, dim_p), lambda i: (0, 0)),  # w2 resident
                    pl.BlockSpec((1, dim_p), lambda i: (0, 0)),         # b2
                ],
                out_specs=pl.BlockSpec((tm, dim_p), lambda i: (i, 0)),
            ),
            compiler_params=pltpu.CompilerParams(
                dimension_semantics=("parallel",),
                vmem_limit_bytes=vmem_limit),
            cost_estimate=cost,
        )(x2d, w1p, b1p, w2p, b2p)
    else:
        grid = (num_row_tiles, hidden_p // th)
        need_scratch = jnp.dtype(out_dtype) != jnp.float32
        scratch = [pltpu.VMEM((tm, dim_p), jnp.float32)] if need_scratch else []
        cost = pl.CostEstimate(
            flops=flops, transcendentals=transcendentals,
            # Weights are re-streamed once per row tile under this tiling.
            bytes_accessed=int(rows_p * dim_p * (mat_isz + out_isz)
                               + num_row_tiles * 2 * dim_p * hidden_p * mat_isz
                               + num_row_tiles * (hidden_p + dim_p) * b_isz))
        out = pl.pallas_call(
            _mlp_kernel_chunked,
            out_shape=jax.ShapeDtypeStruct((rows_p, dim_p), out_dtype),
            grid_spec=pltpu.PrefetchScalarGridSpec(
                num_scalar_prefetch=0,
                grid=grid,
                in_specs=[
                    pl.BlockSpec((tm, dim_p), lambda i, h: (i, 0)),   # x tile
                    pl.BlockSpec((dim_p, th), lambda i, h: (0, h)),   # w1 chunk
                    pl.BlockSpec((1, th), lambda i, h: (0, h)),       # b1 chunk
                    pl.BlockSpec((th, dim_p), lambda i, h: (h, 0)),   # w2 chunk
                    pl.BlockSpec((1, dim_p), lambda i, h: (0, 0)),    # b2
                ],
                out_specs=pl.BlockSpec((tm, dim_p), lambda i, h: (i, 0)),
                scratch_shapes=scratch,
            ),
            compiler_params=pltpu.CompilerParams(
                dimension_semantics=("parallel", "arbitrary"),
                vmem_limit_bytes=vmem_limit),
            cost_estimate=cost,
        )(x2d, w1p, b1p, w2p, b2p)

    return out[:rows, :dim].reshape(batch, seq, dim)


def mlp_block_ref(x, w1, b1, w2, b2):
    """Pure-JAX reference matching the PyTorch forward (eval mode)."""
    h = jnp.einsum("bsd,dh->bsh", x, w1) + b1
    h = 0.5 * h * (1.0 + jax.lax.erf(h / jnp.sqrt(2.0)))
    y = jnp.einsum("bsh,hd->bsd", h, w2) + b2
    return y


if __name__ == "__main__":
    # Small shapes consistent with MLPBlock(dim, hidden_dim).
    batch, seq, dim, hidden = 2, 8, 16, 32

    key = jax.random.PRNGKey(0)
    kx, k1, k2, k3, k4 = jax.random.split(key, 5)

    x = jax.random.normal(kx, (batch, seq, dim), dtype=jnp.float32)
    # Parameters stored as (in, out) for the kernel (transpose of nn.Linear).
    w1 = jax.random.normal(k1, (dim, hidden), dtype=jnp.float32) * 0.05
    b1 = jax.random.normal(k2, (hidden,), dtype=jnp.float32) * 0.05
    w2 = jax.random.normal(k3, (hidden, dim), dtype=jnp.float32) * 0.05
    b2 = jax.random.normal(k4, (dim,), dtype=jnp.float32) * 0.05

    run = jax.jit(mlp_block)
    out = jax.block_until_ready(run(x, w1, b1, w2, b2))

    ref = mlp_block_ref(x, w1, b1, w2, b2)
    assert out.shape == (batch, seq, dim)
    assert jnp.allclose(out, ref, atol=1e-5, rtol=1e-5), "mismatch vs reference"

    print("KERNEL_OK")
</pallas_src>

<mosaic_0001>
module attributes {stable_mosaic.version = 11 : i64} {
  func.func @_mlp_kernel_resident(%arg0: i32, %arg1: memref<8x256xf32, #tpu.memory_space<vmem>>, %arg2: memref<256x256xf32, #tpu.memory_space<vmem>>, %arg3: memref<1x256xf32, #tpu.memory_space<vmem>>, %arg4: memref<256x256xf32, #tpu.memory_space<vmem>>, %arg5: memref<1x256xf32, #tpu.memory_space<vmem>>, %arg6: memref<8x256xf32, #tpu.memory_space<vmem>>) attributes {dimension_semantics = [#tpu.dimension_semantics<parallel>], iteration_bounds = array<i64: 2>, scalar_prefetch = 0 : i64, scratch_operands = 0 : i64, tpu.core_type = #tpu.core_type<tc>, window_params = [{transform_indices = @transform_0, window_bounds = array<i64: 8, 256>}, {pipeline_mode = #tpu.pipeline_mode<synchronous>, transform_indices = @transform_1, window_bounds = array<i64: 256, 256>}, {pipeline_mode = #tpu.pipeline_mode<synchronous>, transform_indices = @transform_2, window_bounds = array<i64: 1, 256>}, {pipeline_mode = #tpu.pipeline_mode<synchronous>, transform_indices = @transform_3, window_bounds = array<i64: 256, 256>}, {pipeline_mode = #tpu.pipeline_mode<synchronous>, transform_indices = @transform_4, window_bounds = array<i64: 1, 256>}, {transform_indices = @transform_5, window_bounds = array<i64: 8, 256>}]} {
    %c0 = arith.constant 0 : index
    %c0_0 = arith.constant 0 : index
    %0 = vector.load %arg1[%c0, %c0_0] : memref<8x256xf32, #tpu.memory_space<vmem>>, vector<8x256xf32>
    %c0_1 = arith.constant 0 : index
    %c0_2 = arith.constant 0 : index
    %1 = vector.load %arg2[%c0_1, %c0_2] : memref<256x256xf32, #tpu.memory_space<vmem>>, vector<256x256xf32>
    %cst = arith.constant dense<0.000000e+00> : vector<8x256xf32>
    %2 = tpu.matmul %0, %1, %cst {dimension_numbers = #tpu.dot_dimension_numbers<[1], [0], [0], [1], [0, 0, 1, 1], [], []>} : vector<8x256xf32>, vector<256x256xf32>, vector<8x256xf32> -> vector<8x256xf32>
    %c0_3 = arith.constant 0 : index
    %c0_4 = arith.constant 0 : index
    %3 = vector.load %arg3[%c0_3, %c0_4] : memref<1x256xf32, #tpu.memory_space<vmem>>, vector<1x256xf32>
    %4 = vector.broadcast %3 : vector<1x256xf32> to vector<8x256xf32>
    %5 = arith.addf %2, %4 : vector<8x256xf32>
    %cst_5 = arith.constant 5.000000e-01 : f32
    %6 = vector.broadcast %cst_5 : f32 to vector<8x256xf32>
    %7 = arith.mulf %6, %5 : vector<8x256xf32>
    %cst_6 = arith.constant 0.707106769 : f32
    %8 = vector.broadcast %cst_6 : f32 to vector<8x256xf32>
    %9 = arith.mulf %5, %8 : vector<8x256xf32>
    %10 = math.erf %9 : vector<8x256xf32>
    %cst_7 = arith.constant 1.000000e+00 : f32
    %11 = vector.broadcast %cst_7 : f32 to vector<8x256xf32>
    %12 = arith.addf %11, %10 : vector<8x256xf32>
    %13 = arith.mulf %7, %12 : vector<8x256xf32>
    %c0_8 = arith.constant 0 : index
    %c0_9 = arith.constant 0 : index
    %14 = vector.load %arg4[%c0_8, %c0_9] : memref<256x256xf32, #tpu.memory_space<vmem>>, vector<256x256xf32>
    %cst_10 = arith.constant dense<0.000000e+00> : vector<8x256xf32>
    %15 = tpu.matmul %13, %14, %cst_10 {dimension_numbers = #tpu.dot_dimension_numbers<[1], [0], [0], [1], [0, 0, 1, 1], [], []>} : vector<8x256xf32>, vector<256x256xf32>, vector<8x256xf32> -> vector<8x256xf32>
    %c0_11 = arith.constant 0 : index
    %c0_12 = arith.constant 0 : index
    %16 = vector.load %arg5[%c0_11, %c0_12] : memref<1x256xf32, #tpu.memory_space<vmem>>, vector<1x256xf32>
    %17 = vector.broadcast %16 : vector<1x256xf32> to vector<8x256xf32>
    %18 = arith.addf %15, %17 : vector<8x256xf32>
    %c0_13 = arith.constant 0 : index
    %c0_14 = arith.constant 0 : index
    %19 = vector.load %arg6[%c0_13, %c0_14] : memref<8x256xf32, #tpu.memory_space<vmem>>, vector<8x256xf32>
    tpu.vector_store %arg6[%c0_13, %c0_14], %18 {strides = array<i32>} : memref<8x256xf32, #tpu.memory_space<vmem>>, vector<8x256xf32>,
    return
  }
  func.func @transform_0(%arg0: i32) -> (i32, i32) {
    %c0_i32 = arith.constant 0 : i32
    %c0_i32_0 = arith.constant 0 : i32
    return %arg0, %c0_i32 : i32, i32
  }
  func.func @transform_1(%arg0: i32) -> (i32, i32) {
    %c0_i32 = arith.constant 0 : i32
    %c0_i32_0 = arith.constant 0 : i32
    %c0_i32_1 = arith.constant 0 : i32
    return %c0_i32, %c0_i32_0 : i32, i32
  }
  func.func @transform_2(%arg0: i32) -> (i32, i32) {
    %c0_i32 = arith.constant 0 : i32
    %c0_i32_0 = arith.constant 0 : i32
    %c0_i32_1 = arith.constant 0 : i32
    return %c0_i32, %c0_i32_0 : i32, i32
  }
  func.func @transform_3(%arg0: i32) -> (i32, i32) {
    %c0_i32 = arith.constant 0 : i32
    %c0_i32_0 = arith.constant 0 : i32
    %c0_i32_1 = arith.constant 0 : i32
    return %c0_i32, %c0_i32_0 : i32, i32
  }
  func.func @transform_4(%arg0: i32) -> (i32, i32) {
    %c0_i32 = arith.constant 0 : i32
    %c0_i32_0 = arith.constant 0 : i32
    %c0_i32_1 = arith.constant 0 : i32
    return %c0_i32, %c0_i32_0 : i32, i32
  }
  func.func @transform_5(%arg0: i32) -> (i32, i32) {
    %c0_i32 = arith.constant 0 : i32
    %c0_i32_0 = arith.constant 0 : i32
    return %arg0, %c0_i32 : i32, i32
  }
}

</mosaic_0001>

<llo_original>
// kernel: mlp_block.1
$region0: #{mlp_block.1}
  #allocation0 [shape = 'u32[]', space=smem, size = 0x4, offset = 0x4, fixed_abs, tag = 'smem constant byte address 0x4 - core index']
  #allocation1 [shape = 'u32[144,128]{1,0:T(1,128)}', space=vmem, size = 0x12000, scoped, tag = 'internal scratch']
  %s0 = inlined_call_operand.vmem [shape: f32[16,256], index: 0, kind: input, shape index: {}]
  %s1 = inlined_call_operand.vmem [shape: f32[256,256], index: 1, kind: input, shape index: {}]
  %s2 = inlined_call_operand.vmem [shape: f32[1,256], index: 2, kind: input, shape index: {}]
  %s3 = inlined_call_operand.vmem [shape: f32[256,256], index: 3, kind: input, shape index: {}]
  %s4 = inlined_call_operand.vmem [shape: f32[1,256], index: 4, kind: input, shape index: {}]
  %s5 = inlined_call_operand.vmem [shape: f32[16,256], index: 5, kind: output, shape index: {}]
  %s6 = sld [smem:[#allocation0]]
  $region53: #{mlp_block.1} parent=0
    _
  %s8 = ssub.s32 1, %s6
  %s9 = scalar_select 0, %s8, %s6
  loop: start=0, step=1, limit=4
  $region2: #{mlp_block.1} parent=0 // loop_pre_header
    _
  $region3: #{mlp_block.1} parent=0 // loop_header
    %s11 = sphi 0, %s15
    %p12 = scmp.ge.s32.totalorder %s11, 4
    %s21 = sphi 0, %s23
    %s24 = sphi 0, %s21
    %s25 = sphi 0, %s24
    %s41 = sphi 0, %s25
    %s45 = sphi 0, %s45
    %s47 = sphi 0, %s45
    %s48 = sphi 0, %s47
    %s62 = sphi 0, %s48
    %s66 = sphi 0, %s66
    %s68 = sphi 0, %s66
    %s69 = sphi 0, %s68
    %s83 = sphi 0, %s69
    %s87 = sphi 0, %s87
    %s89 = sphi 0, %s87
    %s90 = sphi 0, %s89
    %s104 = sphi 0, %s90
    %s108 = sphi 0, %s108
    %s110 = sphi 0, %s108
    %s111 = sphi 0, %s110
    %s125 = sphi 0, %s111
    %s131 = sphi 0, %s133
    %s134 = sphi 0, %s131
    %s135 = sphi 0, %s134
    %s151 = sphi 0, %s135
  $region4: #{mlp_block.1} parent=0 // loop_header_branch
    %14 = sbr.rel (%p12) target = $region8
  $region5: #{mlp_block.1} parent=0 // loop_body
    %s16 = ssub.s32 %s11, 1
    %s17 = ssub.s32 %s11, 2
    %s18 = sadd.s32 %s11, 1
    %s19 = ssub.s32 %s11, %s18
    %p20 = scmp.eq.s32.totalorder %s19, 0
    %s22 = sadd.s32 %s21, 1
    %s23 = scalar_select %p20, %s21, %s22
    %p26 = pneg %p20
    %p27 = scmp.eq.s32.totalorder %s11, 1
    %p28 = por %p26, %p27
    %p29 = scmp.ne.s32.totalorder %s21, %s24
    %p30 = scmp.eq.s32.totalorder %s11, 0
    %p31 = por %p29, %p30
    %p32 = scmp.ne.s32.totalorder %s21, %s24
    %p33 = scmp.eq.s32.totalorder %s16, 1
    %p34 = por %p32, %p33
    %p35 = scmp.ne.s32.totalorder %s24, %s25
    %p36 = scmp.eq.s32.totalorder %s16, 0
    %p37 = por %p35, %p36
    %p38 = scmp.ne.s32.totalorder %s24, %s25
    %p39 = scmp.eq.s32.totalorder %s17, 1
    %p40 = por %p38, %p39
    %p42 = scmp.ne.s32.totalorder %s25, %s41
    %p43 = scmp.eq.s32.totalorder %s17, 0
    %p44 = por %p42, %p43
    %s46 = sadd.s32 %s45, 1
    %p49 = scmp.eq.s32.totalorder %s11, 1
    %p50 = scmp.ne.s32.totalorder %s45, %s47
    %p51 = scmp.eq.s32.totalorder %s11, 0
    %p52 = por %p50, %p51
    %p53 = scmp.ne.s32.totalorder %s45, %s47
    %p54 = scmp.eq.s32.totalorder %s16, 1
    %p55 = por %p53, %p54
    %p56 = scmp.ne.s32.totalorder %s47, %s48
    %p57 = scmp.eq.s32.totalorder %s16, 0
    %p58 = por %p56, %p57
    %p59 = scmp.ne.s32.totalorder %s47, %s48
    %p60 = scmp.eq.s32.totalorder %s17, 1
    %p61 = por %p59, %p60
    %p63 = scmp.ne.s32.totalorder %s48, %s62
    %p64 = scmp.eq.s32.totalorder %s17, 0
    %p65 = por %p63, %p64
    %s67 = sadd.s32 %s66, 1
    %p70 = scmp.eq.s32.totalorder %s11, 1
    %p71 = scmp.ne.s32.totalorder %s66, %s68
    %p72 = scmp.eq.s32.totalorder %s11, 0
    %p73 = por %p71, %p72
    %p74 = scmp.ne.s32.totalorder %s66, %s68
    %p75 = scmp.eq.s32.totalorder %s16, 1
    %p76 = por %p74, %p75
    %p77 = scmp.ne.s32.totalorder %s68, %s69
    %p78 = scmp.eq.s32.totalorder %s16, 0
    %p79 = por %p77, %p78
    %p80 = scmp.ne.s32.totalorder %s68, %s69
    %p81 = scmp.eq.s32.totalorder %s17, 1
    %p82 = por %p80, %p81
    %p84 = scmp.ne.s32.totalorder %s69, %s83
    %p85 = scmp.eq.s32.totalorder %s17, 0
    %p86 = por %p84, %p85
    %s88 = sadd.s32 %s87, 1
    %p91 = scmp.eq.s32.totalorder %s11, 1
    %p92 = scmp.ne.s32.totalorder %s87, %s89
    %p93 = scmp.eq.s32.totalorder %s11, 0
    %p94 = por %p92, %p93
    %p95 = scmp.ne.s32.totalorder %s87, %s89
    %p96 = scmp.eq.s32.totalorder %s16, 1
    %p97 = por %p95, %p96
    %p98 = scmp.ne.s32.totalorder %s89, %s90
    %p99 = scmp.eq.s32.totalorder %s16, 0
    %p100 = por %p98, %p99
    %p101 = scmp.ne.s32.totalorder %s89, %s90
    %p102 = scmp.eq.s32.totalorder %s17, 1
    %p103 = por %p101, %p102
    %p105 = scmp.ne.s32.totalorder %s90, %s104
    %p106 = scmp.eq.s32.totalorder %s17, 0
    %p107 = por %p105, %p106
    %s109 = sadd.s32 %s108, 1
    %p112 = scmp.eq.s32.totalorder %s11, 1
    %p113 = scmp.ne.s32.totalorder %s108, %s110
    %p114 = scmp.eq.s32.totalorder %s11, 0
    %p115 = por %p113, %p114
    %p116 = scmp.ne.s32.totalorder %s108, %s110
    %p117 = scmp.eq.s32.totalorder %s16, 1
    %p118 = por %p116, %p117
    %p119 = scmp.ne.s32.totalorder %s110, %s111
    %p120 = scmp.eq.s32.totalorder %s16, 0
    %p121 = por %p119, %p120
    %p122 = scmp.ne.s32.totalorder %s110, %s111
    %p123 = scmp.eq.s32.totalorder %s17, 1
    %p124 = por %p122, %p123
    %p126 = scmp.ne.s32.totalorder %s111, %s125
    %p127 = scmp.eq.s32.totalorder %s17, 0
    %p128 = por %p126, %p127
    %s129 = ssub.s32 %s11, %s18
    %p130 = scmp.eq.s32.totalorder %s129, 0
    %s132 = sadd.s32 %s131, 1
    %s133 = scalar_select %p130, %s131, %s132
    %p136 = pneg %p130
    %p137 = scmp.eq.s32.totalorder %s11, 1
    %p138 = por %p136, %p137
    %p139 = scmp.ne.s32.totalorder %s131, %s134
    %p140 = scmp.eq.s32.totalorder %s11, 0
    %p141 = por %p139, %p140
    %p142 = scmp.ne.s32.totalorder %s131, %s134
    %p143 = scmp.eq.s32.totalorder %s16, 1
    %p144 = por %p142, %p143
    %p145 = scmp.ne.s32.totalorder %s134, %s135
    %p146 = scmp.eq.s32.totalorder %s16, 0
    %p147 = por %p145, %p146
    %p148 = scmp.ne.s32.totalorder %s134, %s135
    %p149 = scmp.eq.s32.totalorder %s17, 1
    %p150 = por %p148, %p149
    %p152 = scmp.ne.s32.totalorder %s135, %s151
    %p153 = scmp.eq.s32.totalorder %s17, 0
    %p154 = por %p152, %p153
    %p155 = scmp.le.s32.totalorder 1, %s11
    %p156 = scmp.lt.s32.totalorder %s11, 3
    %p157 = pnand %p155, %p156
    %p158 = pneg %p157
    // Predicated region
    $region9: #{mlp_block.1} parent=5 // pred_check
      _
    $region10: #{mlp_block.1} parent=5 // pred_check_branch
      %160 = sbr.rel (%p157) target = $region12
    $region11: #{mlp_block.1} parent=5 // pred_region
      %s161 = ssub.s32 %s11, 1
      // Predicated region
      $region13: #{mlp_block.1} parent=11 // pred_check
        %p162 = pneg %p58
      $region14: #{mlp_block.1} parent=11 // pred_check_branch
        %164 = sbr.rel (%p162) target = $region16
      $region15: #{mlp_block.1} parent=11 // pred_region
        _
      $region16: #{mlp_block.1} parent=11 // pred_fallthru
        _
      // Predicated region
      $region17: #{mlp_block.1} parent=11 // pred_check
        %p165 = pneg %p79
      $region18: #{mlp_block.1} parent=11 // pred_check_branch
        %167 = sbr.rel (%p165) target = $region20
      $region19: #{mlp_block.1} parent=11 // pred_region
        _
      $region20: #{mlp_block.1} parent=11 // pred_fallthru
        _
      // Predicated region
      $region21: #{mlp_block.1} parent=11 // pred_check
        %p168 = pneg %p100
      $region22: #{mlp_block.1} parent=11 // pred_check_branch
        %170 = sbr.rel (%p168) target = $region24
      $region23: #{mlp_block.1} parent=11 // pred_region
        _
      $region24: #{mlp_block.1} parent=11 // pred_fallthru
        _
      // Predicated region
      $region25: #{mlp_block.1} parent=11 // pred_check
        %p171 = pneg %p121
      $region26: #{mlp_block.1} parent=11 // pred_check_branch
        %173 = sbr.rel (%p171) target = $region28
      $region27: #{mlp_block.1} parent=11 // pred_region
        _
      $region28: #{mlp_block.1} parent=11 // pred_fallthru
        _
    $region12: #{mlp_block.1} parent=5 // pred_fallthru
      _
    %p174 = scmp.lt.s32.totalorder %s11, 2
    // Predicated region
    $region29: #{mlp_block.1} parent=5 // pred_check
      %p175 = pneg %p174
    $region30: #{mlp_block.1} parent=5 // pred_check_branch
      %177 = sbr.rel (%p175) target = $region32
    $region31: #{mlp_block.1} parent=5 // pred_region
      // Predicated region
      $region33: #{mlp_block.1} parent=31 // pred_check
        %p178 = pneg %p31
      $region34: #{mlp_block.1} parent=31 // pred_check_branch
        %180 = sbr.rel (%p178) target = $region36
      $region35: #{mlp_block.1} parent=31 // pred_region
        %p181 = scmp.lt.s32.totalorder %s11, 1
        %s182 = scalar_select %p181, %s11, 1
        %s183 = smul.addr %s182, 2
        %s184 = smul.addr %s183, 8
        %s185 = scalar_lea.vmem %s0, %s184
      $region36: #{mlp_block.1} parent=31 // pred_fallthru
        _
    $region32: #{mlp_block.1} parent=5 // pred_fallthru
      _
    %p186 = scmp.le.s32.totalorder 1, %s11
    %p187 = scmp.lt.s32.totalorder %s11, 3
    %p188 = pnand %p186, %p187
    %p189 = pneg %p188
    // Predicated region
    $region37: #{mlp_block.1} parent=5 // pred_check
      _
    $region38: #{mlp_block.1} parent=5 // pred_check_branch
      %191 = sbr.rel (%p188) target = $region40
    $region39: #{mlp_block.1} parent=5 // pred_region
      %s192 = ssub.s32 %s11, 1
      %p193 = scmp.lt.s32.totalorder %s16, 1
      %s194 = scalar_select %p193, %s16, 1
      %s195 = smul.addr %s194, 2
      %s196 = smul.addr %s195, 8
      %s197 = scalar_lea.vmem %s0, %s196
      %p198 = pneg %p37
      %p199 = pneg %p34
      %p200 = pneg %p58
      %p201 = pneg %p55
      %p202 = pneg %p79
      %p203 = pneg %p76
      %p204 = pneg %p100
      %p205 = pneg %p97
      %p206 = pneg %p121
      %p207 = pneg %p118
      %p208 = pneg %p147
      %p209 = pneg %p144
      %p210 = scmp.lt.s32.totalorder %s16, 1
      %s211 = scalar_select %p210, %s16, 1
      %s212 = smul.addr %s211, 2
      %s213 = smul.addr %s212, 8
      %s214 = scalar_lea.vmem %s5, %s213
      %p215 = scmp.lt.s32.totalorder %s16, 1
      %s216 = scalar_select %p215, %s16, 1
      %s217 = smul.addr %s216, 2
      %s218 = smul.addr %s217, 8
      %s219 = scalar_lea.vmem %s0, %s218
      %p220 = scmp.lt.s32.totalorder %s16, 1
      %s221 = scalar_select %p220, %s16, 1
      %s222 = smul.addr %s221, 2
      %s223 = smul.addr %s222, 8
      %s224 = scalar_lea.vmem %s5, %s223
      %v225 = vld [vmem:[%s219] sm:$0xff]
      %v226 = vld [vmem:[%s219 + $0x8] sm:$0xff]
      %v227 = vld [vmem:[%s1] sm:$0xff]
      %v228 = vld [vmem:[%s1 + $0x8] sm:$0xff]
      %v229 = vld [vmem:[%s1 + $0x10] sm:$0xff]
      %v230 = vld [vmem:[%s1 + $0x18] sm:$0xff]
      %v231 = vld [vmem:[%s1 + $0x20] sm:$0xff]
      %v232 = vld [vmem:[%s1 + $0x28] sm:$0xff]
      %v233 = vld [vmem:[%s1 + $0x30] sm:$0xff]
      %v234 = vld [vmem:[%s1 + $0x38] sm:$0xff]
      %v235 = vld [vmem:[%s1 + $0x40] sm:$0xff]
      %v236 = vld [vmem:[%s1 + $0x48] sm:$0xff]
      %v237 = vld [vmem:[%s1 + $0x50] sm:$0xff]
      %v238 = vld [vmem:[%s1 + $0x58] sm:$0xff]
      %v239 = vld [vmem:[%s1 + $0x60] sm:$0xff]
      %v240 = vld [vmem:[%s1 + $0x68] sm:$0xff]
      %v241 = vld [vmem:[%s1 + $0x70] sm:$0xff]
      %v242 = vld [vmem:[%s1 + $0x78] sm:$0xff]
      %v243 = vld [vmem:[%s1 + $0x80] sm:$0xff]
      %v244 = vld [vmem:[%s1 + $0x88] sm:$0xff]
      %v245 = vld [vmem:[%s1 + $0x90] sm:$0xff]
      %v246 = vld [vmem:[%s1 + $0x98] sm:$0xff]
      %v247 = vld [vmem:[%s1 + $0xa0] sm:$0xff]
      %v248 = vld [vmem:[%s1 + $0xa8] sm:$0xff]
      %v249 = vld [vmem:[%s1 + $0xb0] sm:$0xff]
      %v250 = vld [vmem:[%s1 + $0xb8] sm:$0xff]
      %v251 = vld [vmem:[%s1 + $0xc0] sm:$0xff]
      %v252 = vld [vmem:[%s1 + $0xc8] sm:$0xff]
      %v253 = vld [vmem:[%s1 + $0xd0] sm:$0xff]
      %v254 = vld [vmem:[%s1 + $0xd8] sm:$0xff]
      %v255 = vld [vmem:[%s1 + $0xe0] sm:$0xff]
      %v256 = vld [vmem:[%s1 + $0xe8] sm:$0xff]
      %v257 = vld [vmem:[%s1 + $0xf0] sm:$0xff]
      %v258 = vld [vmem:[%s1 + $0xf8] sm:$0xff]
      %v259 = vld [vmem:[%s1 + $0x100] sm:$0xff]
      %v260 = vld [vmem:[%s1 + $0x108] sm:$0xff]
      %v261 = vld [vmem:[%s1 + $0x110] sm:$0xff]
      %v262 = vld [vmem:[%s1 + $0x118] sm:$0xff]
      %v263 = vld [vmem:[%s1 + $0x120] sm:$0xff]
      %v264 = vld [vmem:[%s1 + $0x128] sm:$0xff]
      %v265 = vld [vmem:[%s1 + $0x130] sm:$0xff]
      %v266 = vld [vmem:[%s1 + $0x138] sm:$0xff]
      %v267 = vld [vmem:[%s1 + $0x140] sm:$0xff]
      %v268 = vld [vmem:[%s1 + $0x148] sm:$0xff]
      %v269 = vld [vmem:[%s1 + $0x150] sm:$0xff]
      %v270 = vld [vmem:[%s1 + $0x158] sm:$0xff]
      %v271 = vld [vmem:[%s1 + $0x160] sm:$0xff]
      %v272 = vld [vmem:[%s1 + $0x168] sm:$0xff]
      %v273 = vld [vmem:[%s1 + $0x170] sm:$0xff]
      %v274 = vld [vmem:[%s1 + $0x178] sm:$0xff]
      %v275 = vld [vmem:[%s1 + $0x180] sm:$0xff]
      %v276 = vld [vmem:[%s1 + $0x188] sm:$0xff]
      %v277 = vld [vmem:[%s1 + $0x190] sm:$0xff]
      %v278 = vld [vmem:[%s1 + $0x198] sm:$0xff]
      %v279 = vld [vmem:[%s1 + $0x1a0] sm:$0xff]
      %v280 = vld [vmem:[%s1 + $0x1a8] sm:$0xff]
      %v281 = vld [vmem:[%s1 + $0x1b0] sm:$0xff]
      %v282 = vld [vmem:[%s1 + $0x1b8] sm:$0xff]
      %v283 = vld [vmem:[%s1 + $0x1c0] sm:$0xff]
      %v284 = vld [vmem:[%s1 + $0x1c8] sm:$0xff]
      %v285 = vld [vmem:[%s1 + $0x1d0] sm:$0xff]
      %v286 = vld [vmem:[%s1 + $0x1d8] sm:$0xff]
      %v287 = vld [vmem:[%s1 + $0x1e0] sm:$0xff]
      %v288 = vld [vmem:[%s1 + $0x1e8] sm:$0xff]
      %v289 = vld [vmem:[%s1 + $0x1f0] sm:$0xff]
      %v290 = vld [vmem:[%s1 + $0x1f8] sm:$0xff]
      %v291 = vld [vmem:[%s2] sm:$0x3]
      %v293 = vlaneseq
      %v294 = vshrl.u32 %v293, 7
      %v295 = vsub.s32 0, %v294
      %v296 = vrot.slane %v291, %v295
      %v297 = vlaneseq
      %v298 = vshrl.u32 %v297, 7
      %v299 = vsub.s32 1, %v298
      %v300 = vrot.slane %v291, %v299
      %303 = vmatprep.subr.mxu0 %v258
      %304 = vmatpush1.msra.mxu0 %v257
      %305 = vmatprep.subr.mxu0 %v256
      %306 = vmatpush1.msra.mxu0 %v255
      %307 = vmatprep.subr.mxu0 %v254
      %308 = vmatpush1.msra.mxu0 %v253
      %309 = vmatprep.subr.mxu0 %v252
      %310 = vmatpush1.msra.mxu0 %v251
      %311 = vmatprep.subr.mxu0 %v250
      %312 = vmatpush1.msra.mxu0 %v249
      %313 = vmatprep.subr.mxu0 %v248
      %314 = vmatpush1.msra.mxu0 %v247
      %315 = vmatprep.subr.mxu0 %v246
      %316 = vmatpush1.msra.mxu0 %v245
      %317 = vmatprep.subr.mxu0 %v244
      %318 = vmatpush1.msra.mxu0 %v243
      %319 = vmatprep.subr.mxu0 %v242
      %320 = vmatpush1.msra.mxu0 %v241
      %321 = vmatprep.subr.mxu0 %v240
      %322 = vmatpush1.msra.mxu0 %v239
      %323 = vmatprep.subr.mxu0 %v238
      %324 = vmatpush1.msra.mxu0 %v237
      %325 = vmatprep.subr.mxu0 %v236
      %326 = vmatpush1.msra.mxu0 %v235
      %327 = vmatprep.subr.mxu0 %v234
      %328 = vmatpush1.msra.mxu0 %v233
      %329 = vmatprep.subr.mxu0 %v232
      %330 = vmatpush1.msra.mxu0 %v231
      %331 = vmatprep.subr.mxu0 %v230
      %332 = vmatpush1.msra.mxu0 %v229
      %333 = vmatprep.subr.mxu0 %v228
      %334 = vmatpush1.msra.mxu0 %v227
      %335 = vmatprep.subr.mxu0 %v290
      %336 = vmatpush2.msra.mxu0 %v289
      %337 = vmatprep.subr.mxu0 %v288
      %338 = vmatpush2.msra.mxu0 %v287
      %339 = vmatprep.subr.mxu0 %v286
      %340 = vmatpush2.msra.mxu0 %v285
      %341 = vmatprep.subr.mxu0 %v284
      %342 = vmatpush2.msra.mxu0 %v283
      %343 = vmatprep.subr.mxu0 %v282
      %344 = vmatpush2.msra.mxu0 %v281
      %345 = vmatprep.subr.mxu0 %v280
      %346 = vmatpush2.msra.mxu0 %v279
      %347 = vmatprep.subr.mxu0 %v278
      %348 = vmatpush2.msra.mxu0 %v277
      %349 = vmatprep.subr.mxu0 %v276
      %350 = vmatpush2.msra.mxu0 %v275
      %351 = vmatprep.subr.mxu0 %v274
      %352 = vmatpush2.msra.mxu0 %v273
      %353 = vmatprep.subr.mxu0 %v272
      %354 = vmatpush2.msra.mxu0 %v271
      %355 = vmatprep.subr.mxu0 %v270
      %356 = vmatpush2.msra.mxu0 %v269
      %357 = vmatprep.subr.mxu0 %v268
      %358 = vmatpush2.msra.mxu0 %v267
      %359 = vmatprep.subr.mxu0 %v266
      %360 = vmatpush2.msra.mxu0 %v265
      %361 = vmatprep.subr.mxu0 %v264
      %362 = vmatpush2.msra.mxu0 %v263
      %363 = vmatprep.subr.mxu0 %v262
      %364 = vmatpush2.msra.mxu0 %v261
      %365 = vmatprep.subr.mxu0 %v260
      %366 = vmatpush2.msra.mxu0 %v259
      %367 = vmatprep.mubr.f32.mxu0 %v226
      %368 = vmatmul.mubr.f32.gmra.mxu0 %v225
      %v369 = vpop.f32.mrf.mxu0
      %v370 = vadd.f32 %v296, %v369
      %v371 = vpop.f32.mrf.mxu0
      %v372 = vadd.f32 %v300, %v371
      %373 = vdwg.mxu0
      %v374 = vmul.f32 %v370, 0.5
      %v375 = vmul.f32 %v372, 0.5
      %v376 = vmul.f32 %v370, 0.70710677
      %v377 = vmul.f32 %v372, 0.70710677
      %v378 = verf.f32.pop %v376
      %v379 = verf.f32.pop %v377
      %v380 = vadd.f32 %v378, 1.0
      %v381 = vadd.f32 %v379, 1.0
      %v382 = vmul.f32 %v374, %v380
      %v383 = vmul.f32 %v375, %v381
      %v384 = vld [vmem:[%s3] sm:$0xff]
      %v385 = vld [vmem:[%s3 + $0x8] sm:$0xff]
      %v386 = vld [vmem:[%s3 + $0x10] sm:$0xff]
      %v387 = vld [vmem:[%s3 + $0x18] sm:$0xff]
      %v388 = vld [vmem:[%s3 + $0x20] sm:$0xff]
      %v389 = vld [vmem:[%s3 + $0x28] sm:$0xff]
      %v390 = vld [vmem:[%s3 + $0x30] sm:$0xff]
      %v391 = vld [vmem:[%s3 + $0x38] sm:$0xff]
      %v392 = vld [vmem:[%s3 + $0x40] sm:$0xff]
      %v393 = vld [vmem:[%s3 + $0x48] sm:$0xff]
      %v394 = vld [vmem:[%s3 + $0x50] sm:$0xff]
      %v395 = vld [vmem:[%s3 + $0x58] sm:$0xff]
      %v396 = vld [vmem:[%s3 + $0x60] sm:$0xff]
      %v397 = vld [vmem:[%s3 + $0x68] sm:$0xff]
      %v398 = vld [vmem:[%s3 + $0x70] sm:$0xff]
      %v399 = vld [vmem:[%s3 + $0x78] sm:$0xff]
      %v400 = vld [vmem:[%s3 + $0x80] sm:$0xff]
      %v401 = vld [vmem:[%s3 + $0x88] sm:$0xff]
      %v402 = vld [vmem:[%s3 + $0x90] sm:$0xff]
      %v403 = vld [vmem:[%s3 + $0x98] sm:$0xff]
      %v404 = vld [vmem:[%s3 + $0xa0] sm:$0xff]
      %v405 = vld [vmem:[%s3 + $0xa8] sm:$0xff]
      %v406 = vld [vmem:[%s3 + $0xb0] sm:$0xff]
      %v407 = vld [vmem:[%s3 + $0xb8] sm:$0xff]
      %v408 = vld [vmem:[%s3 + $0xc0] sm:$0xff]
      %v409 = vld [vmem:[%s3 + $0xc8] sm:$0xff]
      %v410 = vld [vmem:[%s3 + $0xd0] sm:$0xff]
      %v411 = vld [vmem:[%s3 + $0xd8] sm:$0xff]
      %v412 = vld [vmem:[%s3 + $0xe0] sm:$0xff]
      %v413 = vld [vmem:[%s3 + $0xe8] sm:$0xff]
      %v414 = vld [vmem:[%s3 + $0xf0] sm:$0xff]
      %v415 = vld [vmem:[%s3 + $0xf8] sm:$0xff]
      %v416 = vld [vmem:[%s3 + $0x100] sm:$0xff]
      %v417 = vld [vmem:[%s3 + $0x108] sm:$0xff]
      %v418 = vld [vmem:[%s3 + $0x110] sm:$0xff]
      %v419 = vld [vmem:[%s3 + $0x118] sm:$0xff]
      %v420 = vld [vmem:[%s3 + $0x120] sm:$0xff]
      %v421 = vld [vmem:[%s3 + $0x128] sm:$0xff]
      %v422 = vld [vmem:[%s3 + $0x130] sm:$0xff]
      %v423 = vld [vmem:[%s3 + $0x138] sm:$0xff]
      %v424 = vld [vmem:[%s3 + $0x140] sm:$0xff]
      %v425 = vld [vmem:[%s3 + $0x148] sm:$0xff]
      %v426 = vld [vmem:[%s3 + $0x150] sm:$0xff]
      %v427 = vld [vmem:[%s3 + $0x158] sm:$0xff]
      %v428 = vld [vmem:[%s3 + $0x160] sm:$0xff]
      %v429 = vld [vmem:[%s3 + $0x168] sm:$0xff]
      %v430 = vld [vmem:[%s3 + $0x170] sm:$0xff]
      %v431 = vld [vmem:[%s3 + $0x178] sm:$0xff]
      %v432 = vld [vmem:[%s3 + $0x180] sm:$0xff]
      %v433 = vld [vmem:[%s3 + $0x188] sm:$0xff]
      %v434 = vld [vmem:[%s3 + $0x190] sm:$0xff]
      %v435 = vld [vmem:[%s3 + $0x198] sm:$0xff]
      %v436 = vld [vmem:[%s3 + $0x1a0] sm:$0xff]
      %v437 = vld [vmem:[%s3 + $0x1a8] sm:$0xff]
      %v438 = vld [vmem:[%s3 + $0x1b0] sm:$0xff]
      %v439 = vld [vmem:[%s3 + $0x1b8] sm:$0xff]
      %v440 = vld [vmem:[%s3 + $0x1c0] sm:$0xff]
      %v441 = vld [vmem:[%s3 + $0x1c8] sm:$0xff]
      %v442 = vld [vmem:[%s3 + $0x1d0] sm:$0xff]
      %v443 = vld [vmem:[%s3 + $0x1d8] sm:$0xff]
      %v444 = vld [vmem:[%s3 + $0x1e0] sm:$0xff]
      %v445 = vld [vmem:[%s3 + $0x1e8] sm:$0xff]
      %v446 = vld [vmem:[%s3 + $0x1f0] sm:$0xff]
      %v447 = vld [vmem:[%s3 + $0x1f8] sm:$0xff]
      %v448 = vld [vmem:[%s4] sm:$0x3]
      %v450 = vlaneseq
      %v451 = vshrl.u32 %v450, 7
      %v452 = vsub.s32 0, %v451
      %v453 = vrot.slane %v448, %v452
      %v454 = vlaneseq
      %v455 = vshrl.u32 %v454, 7
      %v456 = vsub.s32 1, %v455
      %v457 = vrot.slane %v448, %v456
      %460 = vmatprep.subr.mxu0 %v415
      %461 = vmatpush1.msra.mxu0 %v414
      %462 = vmatprep.subr.mxu0 %v413
      %463 = vmatpush1.msra.mxu0 %v412
      %464 = vmatprep.subr.mxu0 %v411
      %465 = vmatpush1.msra.mxu0 %v410
      %466 = vmatprep.subr.mxu0 %v409
      %467 = vmatpush1.msra.mxu0 %v408
      %468 = vmatprep.subr.mxu0 %v407
      %469 = vmatpush1.msra.mxu0 %v406
      %470 = vmatprep.subr.mxu0 %v405
      %471 = vmatpush1.msra.mxu0 %v404
      %472 = vmatprep.subr.mxu0 %v403
      %473 = vmatpush1.msra.mxu0 %v402
      %474 = vmatprep.subr.mxu0 %v401
      %475 = vmatpush1.msra.mxu0 %v400
      %476 = vmatprep.subr.mxu0 %v399
      %477 = vmatpush1.msra.mxu0 %v398
      %478 = vmatprep.subr.mxu0 %v397
      %479 = vmatpush1.msra.mxu0 %v396
      %480 = vmatprep.subr.mxu0 %v395
      %481 = vmatpush1.msra.mxu0 %v394
      %482 = vmatprep.subr.mxu0 %v393
      %483 = vmatpush1.msra.mxu0 %v392
      %484 = vmatprep.subr.mxu0 %v391
      %485 = vmatpush1.msra.mxu0 %v390
      %486 = vmatprep.subr.mxu0 %v389
      %487 = vmatpush1.msra.mxu0 %v388
      %488 = vmatprep.subr.mxu0 %v387
      %489 = vmatpush1.msra.mxu0 %v386
      %490 = vmatprep.subr.mxu0 %v385
      %491 = vmatpush1.msra.mxu0 %v384
      %492 = vmatprep.subr.mxu0 %v447
      %493 = vmatpush2.msra.mxu0 %v446
      %494 = vmatprep.subr.mxu0 %v445
      %495 = vmatpush2.msra.mxu0 %v444
      %496 = vmatprep.subr.mxu0 %v443
      %497 = vmatpush2.msra.mxu0 %v442
      %498 = vmatprep.subr.mxu0 %v441
      %499 = vmatpush2.msra.mxu0 %v440
      %500 = vmatprep.subr.mxu0 %v439
      %501 = vmatpush2.msra.mxu0 %v438
      %502 = vmatprep.subr.mxu0 %v437
      %503 = vmatpush2.msra.mxu0 %v436
      %504 = vmatprep.subr.mxu0 %v435
      %505 = vmatpush2.msra.mxu0 %v434
      %506 = vmatprep.subr.mxu0 %v433
      %507 = vmatpush2.msra.mxu0 %v432
      %508 = vmatprep.subr.mxu0 %v431
      %509 = vmatpush2.msra.mxu0 %v430
      %510 = vmatprep.subr.mxu0 %v429
      %511 = vmatpush2.msra.mxu0 %v428
      %512 = vmatprep.subr.mxu0 %v427
      %513 = vmatpush2.msra.mxu0 %v426
      %514 = vmatprep.subr.mxu0 %v425
      %515 = vmatpush2.msra.mxu0 %v424
      %516 = vmatprep.subr.mxu0 %v423
      %517 = vmatpush2.msra.mxu0 %v422
      %518 = vmatprep.subr.mxu0 %v421
      %519 = vmatpush2.msra.mxu0 %v420
      %520 = vmatprep.subr.mxu0 %v419
      %521 = vmatpush2.msra.mxu0 %v418
      %522 = vmatprep.subr.mxu0 %v417
      %523 = vmatpush2.msra.mxu0 %v416
      %524 = vmatprep.mubr.f32.mxu0 %v383
      %525 = vmatmul.mubr.f32.gmra.mxu0 %v382
      %v526 = vpop.f32.mrf.mxu0
      %v527 = vadd.f32 %v453, %v526
      %v528 = vpop.f32.mrf.mxu0
      %v529 = vadd.f32 %v457, %v528
      %530 = vdwg.mxu0
      %531 = vst [vmem:[%s224] sm:$0xff] %v527
      %532 = vst [vmem:[%s224 + $0x8] sm:$0xff] %v529
      %p533 = scmp.lt.s32.totalorder %s16, 1
      %s534 = scalar_select %p533, %s16, 1
      %s535 = smul.addr %s534, 2
      %s536 = smul.addr %s535, 8
      %s537 = scalar_lea.vmem %s5, %s536
      // Predicated region
      $region41: #{mlp_block.1} parent=39 // pred_check
        %p538 = pneg %p144
      $region42: #{mlp_block.1} parent=39 // pred_check_branch
        %540 = sbr.rel (%p538) target = $region44
      $region43: #{mlp_block.1} parent=39 // pred_region
        _
      $region44: #{mlp_block.1} parent=39 // pred_fallthru
        _
    $region40: #{mlp_block.1} parent=5 // pred_fallthru
      _
    %p541 = scmp.le.s32.totalorder 2, %s11
    // Predicated region
    $region45: #{mlp_block.1} parent=5 // pred_check
      %p542 = pneg %p541
    $region46: #{mlp_block.1} parent=5 // pred_check_branch
      %544 = sbr.rel (%p542) target = $region48
    $region47: #{mlp_block.1} parent=5 // pred_region
      %s545 = ssub.s32 %s11, 2
      // Predicated region
      $region49: #{mlp_block.1} parent=47 // pred_check
        %p546 = pneg %p150
      $region50: #{mlp_block.1} parent=47 // pred_check_branch
        %548 = sbr.rel (%p546) target = $region52
      $region51: #{mlp_block.1} parent=47 // pred_region
        %p549 = scmp.lt.s32.totalorder %s17, 1
        %s550 = scalar_select %p549, %s17, 1
        %s551 = smul.addr %s550, 2
        %s552 = smul.addr %s551, 8
        %s553 = scalar_lea.vmem %s5, %s552
      $region52: #{mlp_block.1} parent=47 // pred_fallthru
        _
    $region48: #{mlp_block.1} parent=5 // pred_fallthru
      _
  $region6: #{mlp_block.1} parent=0 // loop_footer
    %s15 = sadd.s32 1, %s11
  $region7: #{mlp_block.1} parent=0 // loop_footer_branch
    %10 = sbr.rel target = $region3
  $region8: #{mlp_block.1} parent=0 // loop_exit
    _

</llo_original>
